<compile_context>
chip_gen: v5e
topology: v5e:2x2
jax: 0.10.0
libtpu: 0.0.40
codegen_flags: <defaults>
</compile_context>

<pallas_src>
import jax
import jax.numpy as jnp
from jax import lax
from jax.experimental import pallas as pl
from jax.experimental.pallas import tpu as pltpu


_LANES = 1024                       # preferred lane-dense last dim
_NUM_SPLITS = 2                     # leading "parallel" core axis (v7x: 2 TCs)
_TARGET_BLOCK_BYTES = 4 * 1024 * 1024   # ~4 MiB per streamed input block
_MAX_BLOCK_ELEMS = 2 * 1024 * 1024      # caps whole-block f32 temps at 8 MiB


def _round_up(x: int, m: int) -> int:
    return (x + m - 1) // m * m


def _jax_loss(x_hat, x, mu, logsigma2, beta):
    """Plain-JAX reference / tiny-input fast path."""
    x_hat = x_hat.astype(jnp.float32)
    x = x.astype(jnp.float32)
    mu = mu.astype(jnp.float32)
    ls = logsigma2.astype(jnp.float32)
    mse = jnp.mean((x_hat - x) ** 2)
    prior = jnp.sum(1.0 + ls - mu ** 2 - jnp.exp(ls), axis=1)
    return mse + beta * jnp.mean(-0.5 * prior)


def _make_loss_kernel(*, inv_nx, kl_scale, bph, tile_r, rows_total, lanes,
                      needs_mask):
    def loss_kernel(xhat_ref, x_ref, mu_ref, ls_ref, out_ref, acc_ref):
        c = pl.program_id(0)        # core-split index ("parallel")
        j = pl.program_id(1)        # per-core block index ("arbitrary")

        @pl.when(j == 0)
        def _init():
            acc_ref[...] = jnp.zeros_like(acc_ref)

        # Streamed MSE partial: in-kernel cast, diff, square, fold the
        # (tile_r, lanes) block into the (8, lanes) f32 accumulator with pure
        # VPU adds.  Steady state is vld + VPU only -> DMA stays the bottleneck.
        d = xhat_ref[...].astype(jnp.float32) - x_ref[...].astype(jnp.float32)
        sq = d * d
        if needs_mask:
            # Boundary / duplicated blocks: rows beyond the valid row count
            # hold garbage (or re-read data) and MUST contribute zero.
            g = c * bph + j                       # global (unclamped) block idx
            remaining = rows_total - g * tile_r   # may be <= 0 for dup blocks
            row_ids = lax.broadcasted_iota(jnp.int32, (tile_r, 1), 0)
            sq = jnp.where(row_ids < remaining, sq, 0.0)
        acc_ref[...] += jnp.sum(sq.reshape(-1, 8, lanes), axis=0)

        # Epilogue: once per core -- single cross-lane reduce, 1/N scale,
        # tiny KL term (core 0 only), lane-dense store of the partial.
        @pl.when(j == pl.num_programs(1) - 1)
        def _finalize():
            partial = jnp.sum(acc_ref[...]) * inv_nx
            ls = ls_ref[...].astype(jnp.float32)
            mu = mu_ref[...].astype(jnp.float32)
            kl = kl_scale * jnp.sum(1.0 + ls - mu * mu - jnp.exp(ls))
            val = partial + jnp.where(c == 0, kl, 0.0)
            out_ref[...] = jnp.full((8, 128), val, dtype=jnp.float32)

    return loss_kernel


def variational_loss(x_hat, x, mu, logsigma2, beta=1.0, max_tile_rows=None):
    """JAX/Pallas equivalent of VariationalLoss.forward.  Returns scalar f32."""
    assert x_hat.shape == x.shape
    assert mu.shape == logsigma2.shape

    n_x = x_hat.size
    batch = mu.shape[0]

    # ---- zero-copy lane-dense streaming layout ------------------------------
    # Largest multiple of 128 (<= 1024) that divides n_x -> free reshape.
    lanes = next((c for c in range(_LANES, 0, -128) if n_x % c == 0), None)
    pad_elems = 0
    if lanes is None:
        # Rare ragged case (n_x not a multiple of 128): pad to a multiple of
        # _LANES.  Zero padding on BOTH operands contributes 0 to the SSE.
        # TODO(synk): this materializes a copy of the reconstruction tensors;
        # a tail-handling kernel path could avoid it.
        lanes = _LANES
        pad_elems = _round_up(n_x, lanes) - n_x
    rows_total = (n_x + pad_elems) // lanes

    if rows_total < 16:
        # Tiny input: launch / tiling overhead dwarfs the work.
        return _jax_loss(x_hat, x, mu, logsigma2, beta)

    flat_xh = x_hat.reshape(-1)
    flat_x = x.reshape(-1)
    if pad_elems:
        flat_xh = jnp.pad(flat_xh, (0, pad_elems))
        flat_x = jnp.pad(flat_x, (0, pad_elems))
    xh2 = flat_xh.reshape(rows_total, lanes)      # contiguous reshape: no copy
    x2 = flat_x.reshape(rows_total, lanes)

    mu2 = mu.reshape(batch, -1)
    ls2 = logsigma2.reshape(batch, -1)

    # ---- byte-driven tile sizing --------------------------------------------
    itemsize = jnp.dtype(x_hat.dtype).itemsize
    rows_by_bytes = _TARGET_BLOCK_BYTES // (lanes * itemsize)
    rows_by_elems = _MAX_BLOCK_ELEMS // lanes
    target_rows = max(16, (min(rows_by_bytes, rows_by_elems) // 16) * 16)
    tile_r = min(target_rows, _round_up(rows_total, 16))   # multiple of 16
    if max_tile_rows is not None:
        tile_r = min(tile_r, max(16, (max_tile_rows // 16) * 16))

    num_blocks = pl.cdiv(rows_total, tile_r)
    bph = pl.cdiv(num_blocks, _NUM_SPLITS)        # blocks per core
    # Mask needed whenever the (2 x bph x tile_r) grid over-covers the rows
    # (ragged last block and/or duplicated clamped block on core 1).
    needs_mask = (_NUM_SPLITS * bph * tile_r) != rows_total

    inv_nx = 1.0 / float(n_x)
    kl_scale = -0.5 * float(beta) / float(batch)

    kernel = _make_loss_kernel(inv_nx=inv_nx, kl_scale=kl_scale, bph=bph,
                               tile_r=tile_r, rows_total=rows_total,
                               lanes=lanes, needs_mask=needs_mask)

    def stream_map(c, j):
        # Clamp so the duplicated block on core 1 (odd num_blocks) never DMAs
        # out of bounds; its contribution is zeroed by the in-kernel mask.
        return (jnp.minimum(c * bph + j, num_blocks - 1), 0)

    # ---- explicit VMEM budget (v7x: 64 MiB physical per TC) -----------------
    block_bytes = tile_r * lanes * itemsize
    vmem_est = (
        2 * 2 * block_bytes                 # 2 streamed inputs x double buffer
        + 2 * tile_r * lanes * 4            # whole-block f32 d / sq temporaries
        + 8 * lanes * 4                     # accumulator
        + 4 * mu2.size * 4                  # latent stats (+ buffering slack)
        + _NUM_SPLITS * 8 * 128 * 4         # output
    )
    vmem_limit = int(min(48 * 1024 * 1024,
                         max(32 * 1024 * 1024, vmem_est * 5 // 4)))

    cost = pl.CostEstimate(
        flops=3 * n_x + 6 * mu2.size,
        transcendentals=mu2.size,
        bytes_accessed=2 * n_x * itemsize
        + 2 * mu2.size * jnp.dtype(mu.dtype).itemsize
        + _NUM_SPLITS * 8 * 128 * 4,
    )

    out = pl.pallas_call(
        kernel,
        out_shape=jax.ShapeDtypeStruct((_NUM_SPLITS * 8, 128), jnp.float32),
        grid_spec=pltpu.PrefetchScalarGridSpec(
            num_scalar_prefetch=0,
            grid=(_NUM_SPLITS, bph),
            in_specs=[
                # Streamed, double-buffered reconstruction tiles.
                pl.BlockSpec((tile_r, lanes), stream_map),
                pl.BlockSpec((tile_r, lanes), stream_map),
                # Tiny latent stats: full-array block, constant index ->
                # fetched once and resident in VMEM across the reduction.
                pl.BlockSpec(mu2.shape, lambda c, j: (0, 0)),
                pl.BlockSpec(ls2.shape, lambda c, j: (0, 0)),
            ],
            # One lane-dense (8,128) partial block per core, resident across
            # the reduction axis and written only in the epilogue.
            out_specs=pl.BlockSpec((8, 128), lambda c, j: (c, 0)),
            scratch_shapes=[pltpu.VMEM((8, lanes), jnp.float32)],
        ),
        compiler_params=pltpu.CompilerParams(
            dimension_semantics=("parallel", "arbitrary"),
            vmem_limit_bytes=vmem_limit,
        ),
        cost_estimate=cost,
    )(xh2, x2, mu2, ls2)

    # Final 2-way combine of the per-core partials (core 0 already holds KL).
    return out[0, 0] + out[8, 0]


if __name__ == "__main__":
    key = jax.random.PRNGKey(0)
    k1, k2, k3, k4 = jax.random.split(key, 4)
    Z = 8

    # Case 1: image-like reconstruction -> (16, 1024) zero-copy slab.
    B, C, H, W = 4, 4, 32, 32
    x_hat = jax.random.normal(k1, (B, C, H, W), dtype=jnp.float32)
    x = jax.random.normal(k2, (B, C, H, W), dtype=jnp.float32)
    mu = jax.random.normal(k3, (B, Z), dtype=jnp.float32) * 0.5
    logsigma2 = jax.random.normal(k4, (B, Z), dtype=jnp.float32) * 0.1

    loss = jax.block_until_ready(variational_loss(x_hat, x, mu, logsigma2, beta=1.0))
    ref = _jax_loss(x_hat, x, mu, logsigma2, 1.0)
    assert jnp.allclose(loss, ref, rtol=1e-5, atol=1e-5), (loss, ref)

    # Case 2: multi-block grid with a ragged (masked) last block, both core
    # splits active, non-unit beta, forced small tiles.
    B2, C2, H2, W2 = 2, 5, 64, 64          # n_x = 40960 -> 40 rows of 1024
    xh_b = jax.random.normal(k2, (B2, C2, H2, W2), dtype=jnp.float32)
    x_b = jax.random.normal(k1, (B2, C2, H2, W2), dtype=jnp.float32)
    mu_b = jax.random.normal(k4, (B2, Z), dtype=jnp.float32) * 0.3
    ls_b = jax.random.normal(k3, (B2, Z), dtype=jnp.float32) * 0.2
    loss2 = jax.block_until_ready(
        variational_loss(xh_b, x_b, mu_b, ls_b, beta=0.7, max_tile_rows=16))
    ref2 = _jax_loss(xh_b, x_b, mu_b, ls_b, 0.7)
    assert jnp.allclose(loss2, ref2, rtol=1e-4, atol=1e-4), (loss2, ref2)

    # Case 3: bf16 reconstruction stream (in-kernel cast path).
    loss3 = jax.block_until_ready(
        variational_loss(x_hat.astype(jnp.bfloat16), x.astype(jnp.bfloat16),
                         mu, logsigma2, beta=1.0))
    ref3 = _jax_loss(x_hat.astype(jnp.bfloat16), x.astype(jnp.bfloat16),
                     mu, logsigma2, 1.0)
    assert jnp.allclose(loss3, ref3, rtol=1e-4, atol=1e-4), (loss3, ref3)

    print("KERNEL_OK")
</pallas_src>

<mosaic_0001>
module attributes {stable_mosaic.version = 11 : i64} {
  func.func @loss_kernel(%arg0: i32, %arg1: i32, %arg2: memref<16x1024xf32, #tpu.memory_space<vmem>>, %arg3: memref<16x1024xf32, #tpu.memory_space<vmem>>, %arg4: memref<4x8xf32, #tpu.memory_space<vmem>>, %arg5: memref<4x8xf32, #tpu.memory_space<vmem>>, %arg6: memref<8x128xf32, #tpu.memory_space<vmem>>, %arg7: memref<8x1024xf32, #tpu.memory_space<vmem>>) attributes {dimension_semantics = [#tpu.dimension_semantics<parallel>, #tpu.dimension_semantics<arbitrary>], iteration_bounds = array<i64: 2, 1>, scalar_prefetch = 0 : i64, scratch_operands = 1 : i64, tpu.core_type = #tpu.core_type<tc>, window_params = [{transform_indices = @transform_0, window_bounds = array<i64: 16, 1024>}, {transform_indices = @transform_1, window_bounds = array<i64: 16, 1024>}, {pipeline_mode = #tpu.pipeline_mode<synchronous>, transform_indices = @transform_2, window_bounds = array<i64: 4, 8>}, {pipeline_mode = #tpu.pipeline_mode<synchronous>, transform_indices = @transform_3, window_bounds = array<i64: 4, 8>}, {transform_indices = @transform_4, window_bounds = array<i64: 8, 128>}]} {
    %c0_i32 = arith.constant 0 : i32
    %0 = arith.cmpi eq, %arg1, %c0_i32 : i32
    %1 = arith.extui %0 : i1 to i32
    %c0_i32_0 = arith.constant 0 : i32
    %2 = arith.cmpi ne, %1, %c0_i32_0 : i32
    scf.if %2 {
      %cst_12 = arith.constant 0.000000e+00 : f32
      %26 = vector.broadcast %cst_12 : f32 to vector<8x1024xf32>
      %c0_13 = arith.constant 0 : index
      %c0_14 = arith.constant 0 : index
      %27 = vector.load %arg7[%c0_13, %c0_14] : memref<8x1024xf32, #tpu.memory_space<vmem>>, vector<8x1024xf32>
      tpu.vector_store %arg7[%c0_13, %c0_14], %26 {strides = array<i32>} : memref<8x1024xf32, #tpu.memory_space<vmem>>, vector<8x1024xf32>,
    } else {
    }
    %c0 = arith.constant 0 : index
    %c0_1 = arith.constant 0 : index
    %3 = vector.load %arg2[%c0, %c0_1] : memref<16x1024xf32, #tpu.memory_space<vmem>>, vector<16x1024xf32>
    %c0_2 = arith.constant 0 : index
    %c0_3 = arith.constant 0 : index
    %4 = vector.load %arg3[%c0_2, %c0_3] : memref<16x1024xf32, #tpu.memory_space<vmem>>, vector<16x1024xf32>
    %5 = arith.subf %3, %4 : vector<16x1024xf32>
    %6 = arith.mulf %5, %5 : vector<16x1024xf32>
    %c1_i32 = arith.constant 1 : i32
    %7 = arith.muli %arg0, %c1_i32 : i32
    %8 = arith.addi %7, %arg1 : i32
    %c16_i32 = arith.constant 16 : i32
    %9 = arith.muli %8, %c16_i32 : i32
    %c16_i32_4 = arith.constant 16 : i32
    %10 = arith.subi %c16_i32_4, %9 : i32
    %11 = tpu.iota {dimensions = array<i32: 0>} : vector<16x1xi32>
    %12 = vector.broadcast %10 : i32 to vector<16x1xi32>
    %13 = arith.cmpi slt, %11, %12 : vector<16x1xi32>
    %cst = arith.constant 0.000000e+00 : f32
    %14 = vector.shape_cast %13 : vector<16x1xi1> to vector<16x1xi1>
    %15 = vector.broadcast %14 : vector<16x1xi1> to vector<16x1024xi1>
    %16 = vector.broadcast %cst : f32 to vector<16x1024xf32>
    %17 = arith.select %15, %6, %16 : vector<16x1024xi1>, vector<16x1024xf32>
    %c0_5 = arith.constant 0 : index
    %c0_6 = arith.constant 0 : index
    %18 = vector.load %arg7[%c0_5, %c0_6] : memref<8x1024xf32, #tpu.memory_space<vmem>>, vector<8x1024xf32>
    %19 = vector.shape_cast %17 : vector<16x1024xf32> to vector<2x8x1024xf32>
    %cst_7 = arith.constant dense<0.000000e+00> : vector<8x1024xf32>
    %20 = vector.multi_reduction <add>, %19, %cst_7 [0] : vector<2x8x1024xf32> to vector<8x1024xf32>
    %21 = arith.addf %18, %20 : vector<8x1024xf32>
    %c0_8 = arith.constant 0 : index
    %c0_9 = arith.constant 0 : index
    %22 = vector.load %arg7[%c0_8, %c0_9] : memref<8x1024xf32, #tpu.memory_space<vmem>>, vector<8x1024xf32>
    tpu.vector_store %arg7[%c0_8, %c0_9], %21 {strides = array<i32>} : memref<8x1024xf32, #tpu.memory_space<vmem>>, vector<8x1024xf32>,
    %c0_i32_10 = arith.constant 0 : i32
    %23 = arith.cmpi eq, %arg1, %c0_i32_10 : i32
    %24 = arith.extui %23 : i1 to i32
    %c0_i32_11 = arith.constant 0 : i32
    %25 = arith.cmpi ne, %24, %c0_i32_11 : i32
    scf.if %25 {
      %c0_12 = arith.constant 0 : index
      %c0_13 = arith.constant 0 : index
      %26 = vector.load %arg7[%c0_12, %c0_13] : memref<8x1024xf32, #tpu.memory_space<vmem>>, vector<8x1024xf32>
      %27 = vector.shape_cast %26 : vector<8x1024xf32> to vector<1x8x1024xf32>
      %cst_14 = arith.constant dense<0.000000e+00> : vector<1xf32>
      %28 = vector.multi_reduction <add>, %27, %cst_14 [1, 2] : vector<1x8x1024xf32> to vector<1xf32>
      %29 = vector.shape_cast %28 : vector<1xf32> to vector<1x1x1xf32>
      %30 = vector.extract %29[0, 0, 0] : f32 from vector<1x1x1xf32>
      %cst_15 = arith.constant 6.10351563E-5 : f32
      %31 = arith.mulf %30, %cst_15 : f32
      %c0_16 = arith.constant 0 : index
      %c0_17 = arith.constant 0 : index
      %32 = vector.load %arg5[%c0_16, %c0_17] : memref<4x8xf32, #tpu.memory_space<vmem>>, vector<4x8xf32>
      %c0_18 = arith.constant 0 : index
      %c0_19 = arith.constant 0 : index
      %33 = vector.load %arg4[%c0_18, %c0_19] : memref<4x8xf32, #tpu.memory_space<vmem>>, vector<4x8xf32>
      %cst_20 = arith.constant 1.000000e+00 : f32
      %34 = vector.broadcast %cst_20 : f32 to vector<4x8xf32>
      %35 = arith.addf %34, %32 : vector<4x8xf32>
      %36 = arith.mulf %33, %33 : vector<4x8xf32>
      %37 = arith.subf %35, %36 : vector<4x8xf32>
      %38 = math.exp %32 : vector<4x8xf32>
      %39 = arith.subf %37, %38 : vector<4x8xf32>
      %40 = vector.shape_cast %39 : vector<4x8xf32> to vector<1x4x8xf32>
      %cst_21 = arith.constant dense<0.000000e+00> : vector<1xf32>
      %41 = vector.multi_reduction <add>, %40, %cst_21 [1, 2] : vector<1x4x8xf32> to vector<1xf32>
      %42 = vector.shape_cast %41 : vector<1xf32> to vector<1x1x1xf32>
      %43 = vector.extract %42[0, 0, 0] : f32 from vector<1x1x1xf32>
      %cst_22 = arith.constant -1.250000e-01 : f32
      %44 = arith.mulf %cst_22, %43 : f32
      %c0_i32_23 = arith.constant 0 : i32
      %45 = arith.cmpi eq, %arg0, %c0_i32_23 : i32
      %cst_24 = arith.constant 0.000000e+00 : f32
      %46 = arith.select %45, %44, %cst_24 : f32
      %47 = arith.addf %31, %46 : f32
      %48 = vector.broadcast %47 : f32 to vector<8x128xf32>
      %c0_25 = arith.constant 0 : index
      %c0_26 = arith.constant 0 : index
      %49 = vector.load %arg6[%c0_25, %c0_26] : memref<8x128xf32, #tpu.memory_space<vmem>>, vector<8x128xf32>
      tpu.vector_store %arg6[%c0_25, %c0_26], %48 {strides = array<i32>} : memref<8x128xf32, #tpu.memory_space<vmem>>, vector<8x128xf32>,
    } else {
    }
    return
  }
  func.func @transform_0(%arg0: i32, %arg1: i32) -> (i32, i32) {
    %c1_i32 = arith.constant 1 : i32
    %0 = arith.muli %arg0, %c1_i32 : i32
    %1 = arith.addi %0, %arg1 : i32
    %c0_i32 = arith.constant 0 : i32
    %2 = arith.minsi %1, %c0_i32 : i32
    %c0_i32_0 = arith.constant 0 : i32
    %c0_i32_1 = arith.constant 0 : i32
    return %2, %c0_i32_0 : i32, i32
  }
  func.func @transform_1(%arg0: i32, %arg1: i32) -> (i32, i32) {
    %c1_i32 = arith.constant 1 : i32
    %0 = arith.muli %arg0, %c1_i32 : i32
    %1 = arith.addi %0, %arg1 : i32
    %c0_i32 = arith.constant 0 : i32
    %2 = arith.minsi %1, %c0_i32 : i32
    %c0_i32_0 = arith.constant 0 : i32
    %c0_i32_1 = arith.constant 0 : i32
    return %2, %c0_i32_0 : i32, i32
  }
  func.func @transform_2(%arg0: i32, %arg1: i32) -> (i32, i32) {
    %c0_i32 = arith.constant 0 : i32
    %c0_i32_0 = arith.constant 0 : i32
    %c0_i32_1 = arith.constant 0 : i32
    return %c0_i32, %c0_i32_0 : i32, i32
  }
  func.func @transform_3(%arg0: i32, %arg1: i32) -> (i32, i32) {
    %c0_i32 = arith.constant 0 : i32
    %c0_i32_0 = arith.constant 0 : i32
    %c0_i32_1 = arith.constant 0 : i32
    return %c0_i32, %c0_i32_0 : i32, i32
  }
  func.func @transform_4(%arg0: i32, %arg1: i32) -> (i32, i32) {
    %c0_i32 = arith.constant 0 : i32
    %c0_i32_0 = arith.constant 0 : i32
    return %arg0, %c0_i32 : i32, i32
  }
}

</mosaic_0001>

<llo_original>
// kernel: tpu_custom_call.1
$region0: #{tpu_custom_call.1}
  #allocation0 [shape = 'u32[]', space=smem, size = 0x4, offset = 0x4, fixed_abs, tag = 'smem constant byte address 0x4 - core index']
  #allocation1 [shape = 'u32[72,128]{1,0:T(1,128)}', space=vmem, size = 0x9000, scoped, tag = 'internal scratch']
  #allocation2 [shape = 'f32[8,1024]{1,0:T(8,128)}', space=vmem, size = 0x8000, scoped, tag = 'scratch operand']
  %s0 = inlined_call_operand.hbm [shape: f32[16,1024], index: 0, kind: input, shape index: {}]
  %s1 = inlined_call_operand.hbm [shape: f32[16,1024], index: 1, kind: input, shape index: {}]
  %s2 = inlined_call_operand.hbm [shape: f32[4,8], index: 2, kind: input, shape index: {}]
  %s3 = inlined_call_operand.hbm [shape: f32[4,8], index: 3, kind: input, shape index: {}]
  %s4 = inlined_call_operand.hbm [shape: f32[16,128], index: 4, kind: output, shape index: {}]
  %s5 = sld [smem:[#allocation0]]
  $region73: #{tpu_custom_call.1} parent=0
    _
  %s7 = ssub.s32 1, %s5
  %s8 = scalar_select 0, %s7, %s5
  $region1: #{tpu_custom_call.1} parent=0
    #allocation3 [shape = 'u8[131072]{0}', space=vmem, size = 0x20000, scoped, tag = 'input window, operand 0']
    #allocation4 [shape = 's32[2]{0}', space=sflag, size = 0x8, scoped, tag = 'scoped memory for tpu_custom_call.1']
    #allocation5 [shape = 's32[2]{0}', space=sflag, size = 0x8, scoped, tag = 'scoped memory for tpu_custom_call.1']
    #allocation6 [shape = 'u8[131072]{0}', space=vmem, size = 0x20000, scoped, tag = 'input window, operand 1']
    #allocation7 [shape = 's32[2]{0}', space=sflag, size = 0x8, scoped, tag = 'scoped memory for tpu_custom_call.1']
    #allocation8 [shape = 'u8[2048]{0}', space=vmem, size = 0x800, scoped, tag = 'input window, operand 2, single buffered']
    #allocation9 [shape = 'u8[2048]{0}', space=vmem, size = 0x800, scoped, tag = 'input window, operand 3, single buffered']
    #allocation10 [shape = 's32[1]{0}', space=sflag, size = 0x4, scoped, tag = 'scoped memory for tpu_custom_call.1']
    #allocation11 [shape = 'u8[8192]{0}', space=vmem, size = 0x2000, scoped, tag = 'output window, operand 0']
    %9 = vsyncpa [#allocation4], 0
    %s10 = scalar_lea.sflag [#allocation4], 1
    %11 = vsyncpa %s10, 0
    %12 = vsyncpa [#allocation7], 0
    %s13 = scalar_lea.sflag [#allocation7], 1
    %14 = vsyncpa %s13, 0
    %15 = vsyncpa [#allocation10], 0
    %16 = vsyncpa [#allocation5], 0
    %s17 = scalar_lea.sflag [#allocation5], 1
    %18 = vsyncpa %s17, 0
    loop: start=0, step=1, limit=4
    $region2: #{tpu_custom_call.1} parent=1 // loop_pre_header
      _
    $region3: #{tpu_custom_call.1} parent=1 // loop_header
      %s20 = sphi 0, %s24
      %p21 = scmp.ge.s32.totalorder %s20, 4
      %s27 = sphi 0, %s39
      %s28 = sphi 0, %s35
      %s29 = sphi 0, %s27
      %s30 = sphi 0, %s28
      %s31 = sphi 0, %s29
      %s32 = sphi 0, %s30
      %s48 = sphi 0, %s50
      %s51 = sphi 0, %s48
      %s52 = sphi 0, %s51
      %s68 = sphi 0, %s52
      %s80 = sphi 0, %s82
      %s83 = sphi 0, %s80
      %s84 = sphi 0, %s83
      %s100 = sphi 0, %s84
      %s104 = sphi 0, %s104
      %s106 = sphi 0, %s104
      %s107 = sphi 0, %s106
      %s121 = sphi 0, %s107
      %s125 = sphi 0, %s125
      %s127 = sphi 0, %s125
      %s128 = sphi 0, %s127
      %s142 = sphi 0, %s128
      %s148 = sphi 0, %s150
      %s151 = sphi 0, %s148
      %s152 = sphi 0, %s151
      %s168 = sphi 0, %s152
    $region4: #{tpu_custom_call.1} parent=1 // loop_header_branch
      %23 = sbr.rel (%p21) target = $region8
    $region5: #{tpu_custom_call.1} parent=1 // loop_body
      %s25 = ssub.s32 %s20, 1
      %s26 = ssub.s32 %s20, 2
      %s33 = sadd.s32 1, %s28
      %p34 = scmp.ge.s32.totalorder %s33, 1
      %s35 = scalar_select %p34, 0, %s33
      %s36 = sadd.s32 1, %s27
      %s37 = scalar_select %p34, %s36, %s27
      %p38 = scmp.ge.s32.totalorder %s37, 2
      %s39 = scalar_select %p38, 0, %s37
      %s40 = sadd.s32 %s27, %s28
      %p41 = scmp.lt.s32.totalorder %s40, 0
      %s42 = scalar_select %p41, %s40, 0
      %s43 = sadd.s32 %s39, %s35
      %p44 = scmp.lt.s32.totalorder %s43, 0
      %s45 = scalar_select %p44, %s43, 0
      %s46 = ssub.s32 %s42, %s45
      %p47 = scmp.eq.s32.totalorder %s46, 0
      %s49 = sadd.s32 %s48, 1
      %s50 = scalar_select %p47, %s48, %s49
      %p53 = pneg %p47
      %p54 = scmp.eq.s32.totalorder %s20, 1
      %p55 = por %p53, %p54
      %p56 = scmp.ne.s32.totalorder %s48, %s51
      %p57 = scmp.eq.s32.totalorder %s20, 0
      %p58 = por %p56, %p57
      %p59 = scmp.ne.s32.totalorder %s48, %s51
      %p60 = scmp.eq.s32.totalorder %s25, 1
      %p61 = por %p59, %p60
      %p62 = scmp.ne.s32.totalorder %s51, %s52
      %p63 = scmp.eq.s32.totalorder %s25, 0
      %p64 = por %p62, %p63
      %p65 = scmp.ne.s32.totalorder %s51, %s52
      %p66 = scmp.eq.s32.totalorder %s26, 1
      %p67 = por %p65, %p66
      %p69 = scmp.ne.s32.totalorder %s52, %s68
      %p70 = scmp.eq.s32.totalorder %s26, 0
      %p71 = por %p69, %p70
      %s72 = sadd.s32 %s27, %s28
      %p73 = scmp.lt.s32.totalorder %s72, 0
      %s74 = scalar_select %p73, %s72, 0
      %s75 = sadd.s32 %s39, %s35
      %p76 = scmp.lt.s32.totalorder %s75, 0
      %s77 = scalar_select %p76, %s75, 0
      %s78 = ssub.s32 %s74, %s77
      %p79 = scmp.eq.s32.totalorder %s78, 0
      %s81 = sadd.s32 %s80, 1
      %s82 = scalar_select %p79, %s80, %s81
      %p85 = pneg %p79
      %p86 = scmp.eq.s32.totalorder %s20, 1
      %p87 = por %p85, %p86
      %p88 = scmp.ne.s32.totalorder %s80, %s83
      %p89 = scmp.eq.s32.totalorder %s20, 0
      %p90 = por %p88, %p89
      %p91 = scmp.ne.s32.totalorder %s80, %s83
      %p92 = scmp.eq.s32.totalorder %s25, 1
      %p93 = por %p91, %p92
      %p94 = scmp.ne.s32.totalorder %s83, %s84
      %p95 = scmp.eq.s32.totalorder %s25, 0
      %p96 = por %p94, %p95
      %p97 = scmp.ne.s32.totalorder %s83, %s84
      %p98 = scmp.eq.s32.totalorder %s26, 1
      %p99 = por %p97, %p98
      %p101 = scmp.ne.s32.totalorder %s84, %s100
      %p102 = scmp.eq.s32.totalorder %s26, 0
      %p103 = por %p101, %p102
      %s105 = sadd.s32 %s104, 1
      %p108 = scmp.eq.s32.totalorder %s20, 1
      %p109 = scmp.ne.s32.totalorder %s104, %s106
      %p110 = scmp.eq.s32.totalorder %s20, 0
      %p111 = por %p109, %p110
      %p112 = scmp.ne.s32.totalorder %s104, %s106
      %p113 = scmp.eq.s32.totalorder %s25, 1
      %p114 = por %p112, %p113
      %p115 = scmp.ne.s32.totalorder %s106, %s107
      %p116 = scmp.eq.s32.totalorder %s25, 0
      %p117 = por %p115, %p116
      %p118 = scmp.ne.s32.totalorder %s106, %s107
      %p119 = scmp.eq.s32.totalorder %s26, 1
      %p120 = por %p118, %p119
      %p122 = scmp.ne.s32.totalorder %s107, %s121
      %p123 = scmp.eq.s32.totalorder %s26, 0
      %p124 = por %p122, %p123
      %s126 = sadd.s32 %s125, 1
      %p129 = scmp.eq.s32.totalorder %s20, 1
      %p130 = scmp.ne.s32.totalorder %s125, %s127
      %p131 = scmp.eq.s32.totalorder %s20, 0
      %p132 = por %p130, %p131
      %p133 = scmp.ne.s32.totalorder %s125, %s127
      %p134 = scmp.eq.s32.totalorder %s25, 1
      %p135 = por %p133, %p134
      %p136 = scmp.ne.s32.totalorder %s127, %s128
      %p137 = scmp.eq.s32.totalorder %s25, 0
      %p138 = por %p136, %p137
      %p139 = scmp.ne.s32.totalorder %s127, %s128
      %p140 = scmp.eq.s32.totalorder %s26, 1
      %p141 = por %p139, %p140
      %p143 = scmp.ne.s32.totalorder %s128, %s142
      %p144 = scmp.eq.s32.totalorder %s26, 0
      %p145 = por %p143, %p144
      %s146 = ssub.s32 %s27, %s39
      %p147 = scmp.eq.s32.totalorder %s146, 0
      %s149 = sadd.s32 %s148, 1
      %s150 = scalar_select %p147, %s148, %s149
      %p153 = pneg %p147
      %p154 = scmp.eq.s32.totalorder %s20, 1
      %p155 = por %p153, %p154
      %p156 = scmp.ne.s32.totalorder %s148, %s151
      %p157 = scmp.eq.s32.totalorder %s20, 0
      %p158 = por %p156, %p157
      %p159 = scmp.ne.s32.totalorder %s148, %s151
      %p160 = scmp.eq.s32.totalorder %s25, 1
      %p161 = por %p159, %p160
      %p162 = scmp.ne.s32.totalorder %s151, %s152
      %p163 = scmp.eq.s32.totalorder %s25, 0
      %p164 = por %p162, %p163
      %p165 = scmp.ne.s32.totalorder %s151, %s152
      %p166 = scmp.eq.s32.totalorder %s26, 1
      %p167 = por %p165, %p166
      %p169 = scmp.ne.s32.totalorder %s152, %s168
      %p170 = scmp.eq.s32.totalorder %s26, 0
      %p171 = por %p169, %p170
      %p172 = scmp.le.s32.totalorder 1, %s20
      %p173 = scmp.lt.s32.totalorder %s20, 3
      %p174 = pnand %p172, %p173
      %p175 = pneg %p174
      // Predicated region
      $region9: #{tpu_custom_call.1} parent=5 // pred_check
        _
      $region10: #{tpu_custom_call.1} parent=5 // pred_check_branch
        %177 = sbr.rel (%p174) target = $region12
      $region11: #{tpu_custom_call.1} parent=5 // pred_region
        %s178 = ssub.s32 %s20, 1
        // Predicated region
        $region13: #{tpu_custom_call.1} parent=11 // pred_check
          %p179 = pneg %p117
        $region14: #{tpu_custom_call.1} parent=11 // pred_check_branch
          %181 = sbr.rel (%p179) target = $region16
        $region15: #{tpu_custom_call.1} parent=11 // pred_region
          %183 = vsyncadd [#allocation7], 0
          %s185 = sshll.u32 %s2, 4
          %s186 = int_to_ptr.hbm [resolvable:$true] %s185
          %s187 = sshll.u32 [#allocation8], 4
          %s188 = int_to_ptr.vmem [resolvable:$true] %s187
          %190 = dma.hbm_to_vmem [thread:$0]  %s186, 64, %s188, [#allocation7]
        $region16: #{tpu_custom_call.1} parent=11 // pred_fallthru
          _
        // Predicated region
        $region17: #{tpu_custom_call.1} parent=11 // pred_check
          %p191 = pneg %p138
        $region18: #{tpu_custom_call.1} parent=11 // pred_check_branch
          %193 = sbr.rel (%p191) target = $region20
        $region19: #{tpu_custom_call.1} parent=11 // pred_region
          %195 = vsyncadd [#allocation10], 0
          %s197 = sshll.u32 %s3, 4
          %s198 = int_to_ptr.hbm [resolvable:$true] %s197
          %s199 = sshll.u32 [#allocation9], 4
          %s200 = int_to_ptr.vmem [resolvable:$true] %s199
          %202 = dma.hbm_to_vmem [thread:$0]  %s198, 64, %s200, [#allocation10]
        $region20: #{tpu_custom_call.1} parent=11 // pred_fallthru
          _
      $region12: #{tpu_custom_call.1} parent=5 // pred_fallthru
        _
      %p203 = scmp.lt.s32.totalorder %s20, 2
      // Predicated region
      $region21: #{tpu_custom_call.1} parent=5 // pred_check
        %p204 = pneg %p203
      $region22: #{tpu_custom_call.1} parent=5 // pred_check_branch
        %206 = sbr.rel (%p204) target = $region24
      $region23: #{tpu_custom_call.1} parent=5 // pred_region
        // Predicated region
        $region25: #{tpu_custom_call.1} parent=23 // pred_check
          %p207 = pneg %p58
        $region26: #{tpu_custom_call.1} parent=23 // pred_check_branch
          %209 = sbr.rel (%p207) target = $region28
        $region27: #{tpu_custom_call.1} parent=23 // pred_region
          %s210 = sand.u32 %s48, 1
          %s211 = scalar_lea.sflag [#allocation4], %s210
          %s212 = sand.u32 %s48, 1
          %s213 = smul.addr %s212, 128
          %s214 = scalar_lea.vmem [#allocation3], %s213
          %s215 = sadd.s32 %s27, %s28
          %p216 = scmp.lt.s32.totalorder %s215, 0
          %s217 = scalar_select %p216, %s215, 0
          %s218 = smul.u32 2, %s217
          %220 = vsyncadd %s211, 0
          %s221 = smul.addr %s218, 8
          %s222 = smul.addr %s221, 8
          %s223 = scalar_lea.hbm %s0, %s222
          %s224 = sshll.u32 %s223, 4
          %s225 = int_to_ptr.hbm [resolvable:$true] %s224
          %s226 = sshll.u32 %s214, 4
          %s227 = int_to_ptr.vmem [resolvable:$true] %s226
          %232 = dma.hbm_to_vmem [thread:$0]  %s225, 2048, %s227, %s211, 1024, 1024, 64
        $region28: #{tpu_custom_call.1} parent=23 // pred_fallthru
          _
        // Predicated region
        $region29: #{tpu_custom_call.1} parent=23 // pred_check
          %p233 = pneg %p90
        $region30: #{tpu_custom_call.1} parent=23 // pred_check_branch
          %235 = sbr.rel (%p233) target = $region32
        $region31: #{tpu_custom_call.1} parent=23 // pred_region
          %s236 = sand.u32 %s20, 1
          %s237 = scalar_lea.sflag [#allocation7], %s236
          %s238 = sand.u32 %s80, 1
          %s239 = smul.addr %s238, 128
          %s240 = scalar_lea.vmem [#allocation6], %s239
          %s241 = sadd.s32 %s27, %s28
          %p242 = scmp.lt.s32.totalorder %s241, 0
          %s243 = scalar_select %p242, %s241, 0
          %s244 = smul.u32 2, %s243
          %246 = vsyncadd %s237, 0
          %s247 = smul.addr %s244, 8
          %s248 = smul.addr %s247, 8
          %s249 = scalar_lea.hbm %s1, %s248
          %s250 = sshll.u32 %s249, 4
          %s251 = int_to_ptr.hbm [resolvable:$true] %s250
          %s252 = sshll.u32 %s240, 4
          %s253 = int_to_ptr.vmem [resolvable:$true] %s252
          %258 = dma.hbm_to_vmem [thread:$0]  %s251, 2048, %s253, %s237, 1024, 1024, 64
        $region32: #{tpu_custom_call.1} parent=23 // pred_fallthru
          _
      $region24: #{tpu_custom_call.1} parent=5 // pred_fallthru
        _
      %p259 = scmp.le.s32.totalorder 1, %s20
      %p260 = scmp.lt.s32.totalorder %s20, 3
      %p261 = pnand %p259, %p260
      %p262 = pneg %p261
      // Predicated region
      $region33: #{tpu_custom_call.1} parent=5 // pred_check
        _
      $region34: #{tpu_custom_call.1} parent=5 // pred_check_branch
        %264 = sbr.rel (%p261) target = $region36
      $region35: #{tpu_custom_call.1} parent=5 // pred_region
        %s265 = ssub.s32 %s20, 1
        %s266 = sand.u32 %s51, 1
        %s267 = scalar_lea.sflag [#allocation4], %s266
        %s268 = sand.u32 %s51, 1
        %s269 = smul.addr %s268, 128
        %s270 = scalar_lea.vmem [#allocation3], %s269
        // Predicated region
        $region37: #{tpu_custom_call.1} parent=35 // pred_check
          %p271 = pneg %p64
        $region38: #{tpu_custom_call.1} parent=35 // pred_check_branch
          %273 = sbr.rel (%p271) target = $region40
        $region39: #{tpu_custom_call.1} parent=35 // pred_region
          %275 = dma.done %s267, 2048
        $region40: #{tpu_custom_call.1} parent=35 // pred_fallthru
          _
        %s276 = sand.u32 %s25, 1
        %s277 = scalar_lea.sflag [#allocation7], %s276
        %s278 = sand.u32 %s83, 1
        %s279 = smul.addr %s278, 128
        %s280 = scalar_lea.vmem [#allocation6], %s279
        // Predicated region
        $region41: #{tpu_custom_call.1} parent=35 // pred_check
          %p281 = pneg %p96
        $region42: #{tpu_custom_call.1} parent=35 // pred_check_branch
          %283 = sbr.rel (%p281) target = $region44
        $region43: #{tpu_custom_call.1} parent=35 // pred_region
          %285 = dma.done %s277, 2048
        $region44: #{tpu_custom_call.1} parent=35 // pred_fallthru
          _
        // Predicated region
        $region45: #{tpu_custom_call.1} parent=35 // pred_check
          %p286 = pneg %p117
        $region46: #{tpu_custom_call.1} parent=35 // pred_check_branch
          %288 = sbr.rel (%p286) target = $region48
        $region47: #{tpu_custom_call.1} parent=35 // pred_region
          %290 = dma.done [#allocation7], 64
        $region48: #{tpu_custom_call.1} parent=35 // pred_fallthru
          _
        // Predicated region
        $region49: #{tpu_custom_call.1} parent=35 // pred_check
          %p291 = pneg %p138
        $region50: #{tpu_custom_call.1} parent=35 // pred_check_branch
          %293 = sbr.rel (%p291) target = $region52
        $region51: #{tpu_custom_call.1} parent=35 // pred_region
          %295 = dma.done [#allocation10], 64
        $region52: #{tpu_custom_call.1} parent=35 // pred_fallthru
          _
        %s296 = sand.u32 %s51, 1
        %s297 = scalar_lea.sflag [#allocation4], %s296
        %s298 = sand.u32 %s51, 1
        %s299 = smul.addr %s298, 128
        %s300 = scalar_lea.vmem [#allocation3], %s299
        %p301 = pneg %p64
        %p302 = pneg %p61
        %s303 = sand.u32 %s25, 1
        %s304 = scalar_lea.sflag [#allocation7], %s303
        %s305 = sand.u32 %s83, 1
        %s306 = smul.addr %s305, 128
        %s307 = scalar_lea.vmem [#allocation6], %s306
        %p308 = pneg %p96
        %p309 = pneg %p93
        %p310 = pneg %p117
        %p311 = pneg %p114
        %p312 = pneg %p138
        %p313 = pneg %p135
        %p314 = pneg %p164
        %p315 = pneg %p161
        %s316 = sand.u32 %s151, 1
        %s317 = scalar_lea.sflag [#allocation5], %s316
        %s318 = sand.u32 %s151, 1
        %s319 = smul.addr %s318, 8
        %s320 = scalar_lea.vmem [#allocation11], %s319
        %s321 = sadd.s32 %s29, %s30
        %p322 = scmp.lt.s32.totalorder %s321, 0
        %s323 = scalar_select %p322, %s321, 0
        %s324 = smul.u32 2, %s323
        %s325 = sadd.s32 %s29, %s30
        %p326 = scmp.lt.s32.totalorder %s325, 0
        %s327 = scalar_select %p326, %s325, 0
        %s328 = smul.u32 2, %s327
        %p329 = scmp.eq.s32.totalorder %s30, 0
        // Predicated region
        $region53: #{tpu_custom_call.1} parent=35 // pred_check
          %p330 = pneg %p329
        $region54: #{tpu_custom_call.1} parent=35 // pred_check_branch
          %332 = sbr.rel (%p330) target = $region56
        $region55: #{tpu_custom_call.1} parent=35 // pred_region
          %333 = vst [vmem:[#allocation2] sm:$0xff] 0.0
          %334 = vst [vmem:[#allocation2 + $0x8] sm:$0xff] 0.0
          %335 = vst [vmem:[#allocation2 + $0x10] sm:$0xff] 0.0
          %336 = vst [vmem:[#allocation2 + $0x18] sm:$0xff] 0.0
          %337 = vst [vmem:[#allocation2 + $0x20] sm:$0xff] 0.0
          %338 = vst [vmem:[#allocation2 + $0x28] sm:$0xff] 0.0
          %339 = vst [vmem:[#allocation2 + $0x30] sm:$0xff] 0.0
          %340 = vst [vmem:[#allocation2 + $0x38] sm:$0xff] 0.0
        $region56: #{tpu_custom_call.1} parent=35 // pred_fallthru
          _
        %v341 = vld [vmem:[%s270] sm:$0xff]
        %v342 = vld [vmem:[%s270 + $0x8] sm:$0xff]
        %v343 = vld [vmem:[%s270 + $0x10] sm:$0xff]
        %v344 = vld [vmem:[%s270 + $0x18] sm:$0xff]
        %v345 = vld [vmem:[%s270 + $0x20] sm:$0xff]
        %v346 = vld [vmem:[%s270 + $0x28] sm:$0xff]
        %v347 = vld [vmem:[%s270 + $0x30] sm:$0xff]
        %v348 = vld [vmem:[%s270 + $0x38] sm:$0xff]
        %v349 = vld [vmem:[%s270 + $0x40] sm:$0xff]
        %v350 = vld [vmem:[%s270 + $0x48] sm:$0xff]
        %v351 = vld [vmem:[%s270 + $0x50] sm:$0xff]
        %v352 = vld [vmem:[%s270 + $0x58] sm:$0xff]
        %v353 = vld [vmem:[%s270 + $0x60] sm:$0xff]
        %v354 = vld [vmem:[%s270 + $0x68] sm:$0xff]
        %v355 = vld [vmem:[%s270 + $0x70] sm:$0xff]
        %v356 = vld [vmem:[%s270 + $0x78] sm:$0xff]
        %v357 = vld [vmem:[%s280] sm:$0xff]
        %v358 = vld [vmem:[%s280 + $0x8] sm:$0xff]
        %v359 = vld [vmem:[%s280 + $0x10] sm:$0xff]
        %v360 = vld [vmem:[%s280 + $0x18] sm:$0xff]
        %v361 = vld [vmem:[%s280 + $0x20] sm:$0xff]
        %v362 = vld [vmem:[%s280 + $0x28] sm:$0xff]
        %v363 = vld [vmem:[%s280 + $0x30] sm:$0xff]
        %v364 = vld [vmem:[%s280 + $0x38] sm:$0xff]
        %v365 = vld [vmem:[%s280 + $0x40] sm:$0xff]
        %v366 = vld [vmem:[%s280 + $0x48] sm:$0xff]
        %v367 = vld [vmem:[%s280 + $0x50] sm:$0xff]
        %v368 = vld [vmem:[%s280 + $0x58] sm:$0xff]
        %v369 = vld [vmem:[%s280 + $0x60] sm:$0xff]
        %v370 = vld [vmem:[%s280 + $0x68] sm:$0xff]
        %v371 = vld [vmem:[%s280 + $0x70] sm:$0xff]
        %v372 = vld [vmem:[%s280 + $0x78] sm:$0xff]
        %v373 = vsub.f32 %v341, %v357
        %v374 = vsub.f32 %v342, %v358
        %v375 = vsub.f32 %v343, %v359
        %v376 = vsub.f32 %v344, %v360
        %v377 = vsub.f32 %v345, %v361
        %v378 = vsub.f32 %v346, %v362
        %v379 = vsub.f32 %v347, %v363
        %v380 = vsub.f32 %v348, %v364
        %v381 = vsub.f32 %v349, %v365
        %v382 = vsub.f32 %v350, %v366
        %v383 = vsub.f32 %v351, %v367
        %v384 = vsub.f32 %v352, %v368
        %v385 = vsub.f32 %v353, %v369
        %v386 = vsub.f32 %v354, %v370
        %v387 = vsub.f32 %v355, %v371
        %v388 = vsub.f32 %v356, %v372
        %v389 = vmul.f32 %v373, %v373
        %v390 = vmul.f32 %v374, %v374
        %v391 = vmul.f32 %v375, %v375
        %v392 = vmul.f32 %v376, %v376
        %v393 = vmul.f32 %v377, %v377
        %v394 = vmul.f32 %v378, %v378
        %v395 = vmul.f32 %v379, %v379
        %v396 = vmul.f32 %v380, %v380
        %v397 = vmul.f32 %v381, %v381
        %v398 = vmul.f32 %v382, %v382
        %v399 = vmul.f32 %v383, %v383
        %v400 = vmul.f32 %v384, %v384
        %v401 = vmul.f32 %v385, %v385
        %v402 = vmul.f32 %v386, %v386
        %v403 = vmul.f32 %v387, %v387
        %v404 = vmul.f32 %v388, %v388
        %s405 = sadd.s32 %s29, %s30
        %s406 = smul.u32 %s405, 16
        %s407 = ssub.s32 16, %s406
        %v408 = vlaneseq
        %v409 = vshrl.u32 %v408, 7
        %v410 = vadd.s32 %v409, 8
        %v411 = vstv %s407
        %vm412 = vcmp.lt.s32.totalorder %v409, %v411
        %vm413 = vcmp.lt.s32.totalorder %v410, %v411
        %v414 = vsel %vm412, 1, 0
        %v415 = vsel %vm413, 1, 0
        %vm416 = vcmp.eq.s32.totalorder %v414, 1
        %vm417 = vcmp.eq.s32.totalorder %v415, 1
        %v418 = vsel %vm416, %v389, 0.0
        %v419 = vsel %vm416, %v390, 0.0
        %v420 = vsel %vm416, %v391, 0.0
        %v421 = vsel %vm416, %v392, 0.0
        %v422 = vsel %vm416, %v393, 0.0
        %v423 = vsel %vm416, %v394, 0.0
        %v424 = vsel %vm416, %v395, 0.0
        %v425 = vsel %vm416, %v396, 0.0
        %v426 = vsel %vm417, %v397, 0.0
        %v427 = vsel %vm417, %v398, 0.0
        %v428 = vsel %vm417, %v399, 0.0
        %v429 = vsel %vm417, %v400, 0.0
        %v430 = vsel %vm417, %v401, 0.0
        %v431 = vsel %vm417, %v402, 0.0
        %v432 = vsel %vm417, %v403, 0.0
        %v433 = vsel %vm417, %v404, 0.0
        %v434 = vld [vmem:[#allocation2] sm:$0xff]
        %v435 = vld [vmem:[#allocation2 + $0x8] sm:$0xff]
        %v436 = vld [vmem:[#allocation2 + $0x10] sm:$0xff]
        %v437 = vld [vmem:[#allocation2 + $0x18] sm:$0xff]
        %v438 = vld [vmem:[#allocation2 + $0x20] sm:$0xff]
        %v439 = vld [vmem:[#allocation2 + $0x28] sm:$0xff]
        %v440 = vld [vmem:[#allocation2 + $0x30] sm:$0xff]
        %v441 = vld [vmem:[#allocation2 + $0x38] sm:$0xff]
        %v442 = vadd.f32 %v418, %v426
        %v443 = vadd.f32 %v419, %v427
        %v444 = vadd.f32 %v420, %v428
        %v445 = vadd.f32 %v421, %v429
        %v446 = vadd.f32 %v422, %v430
        %v447 = vadd.f32 %v423, %v431
        %v448 = vadd.f32 %v424, %v432
        %v449 = vadd.f32 %v425, %v433
        %v450 = vadd.f32 %v434, %v442
        %v451 = vadd.f32 %v435, %v443
        %v452 = vadd.f32 %v436, %v444
        %v453 = vadd.f32 %v437, %v445
        %v454 = vadd.f32 %v438, %v446
        %v455 = vadd.f32 %v439, %v447
        %v456 = vadd.f32 %v440, %v448
        %v457 = vadd.f32 %v441, %v449
        %458 = vst [vmem:[#allocation2] sm:$0xff] %v450
        %459 = vst [vmem:[#allocation2 + $0x8] sm:$0xff] %v451
        %460 = vst [vmem:[#allocation2 + $0x10] sm:$0xff] %v452
        %461 = vst [vmem:[#allocation2 + $0x18] sm:$0xff] %v453
        %462 = vst [vmem:[#allocation2 + $0x20] sm:$0xff] %v454
        %463 = vst [vmem:[#allocation2 + $0x28] sm:$0xff] %v455
        %464 = vst [vmem:[#allocation2 + $0x30] sm:$0xff] %v456
        %465 = vst [vmem:[#allocation2 + $0x38] sm:$0xff] %v457
        // Predicated region
        $region57: #{tpu_custom_call.1} parent=35 // pred_check
          %p466 = pneg %p329
        $region58: #{tpu_custom_call.1} parent=35 // pred_check_branch
          %468 = sbr.rel (%p466) target = $region60
        $region59: #{tpu_custom_call.1} parent=35 // pred_region
          %v469 = vld [vmem:[#allocation2] sm:$0xff]
          %v470 = vld [vmem:[#allocation2 + $0x8] sm:$0xff]
          %v471 = vld [vmem:[#allocation2 + $0x10] sm:$0xff]
          %v472 = vld [vmem:[#allocation2 + $0x18] sm:$0xff]
          %v473 = vld [vmem:[#allocation2 + $0x20] sm:$0xff]
          %v474 = vld [vmem:[#allocation2 + $0x28] sm:$0xff]
          %v475 = vld [vmem:[#allocation2 + $0x30] sm:$0xff]
          %v476 = vld [vmem:[#allocation2 + $0x38] sm:$0xff]
          %v477 = vadd.f32 %v469, %v470
          %v478 = vadd.f32 %v477, %v471
          %v479 = vadd.f32 %v478, %v472
          %v480 = vadd.f32 %v479, %v473
          %v481 = vadd.f32 %v480, %v474
          %v482 = vadd.f32 %v481, %v475
          %v483 = vadd.f32 %v482, %v476
          %484 = vadd.xlane.f32.xlu0 %v483
          %v485 = vpop.xlane.xlu0 %484
          %v486 = vrot.slane %v485, 4
          %v487 = vadd.f32 %v485, %v486
          %v488 = vrot.slane %v487, 2
          %v489 = vadd.f32 %v487, %v488
          %v490 = vrot.slane %v489, 1
          %v491 = vadd.f32 %v489, %v490
          %s492 = vtos %v491
          %s493 = smul.f32 %s492, 6.1035156e-05
          %v494 = vld [vmem:[#allocation9] sm:$0xf]
          %v495 = vld [vmem:[#allocation8] sm:$0xf]
          %v496 = vadd.f32 %v494, 1.0
          %v497 = vmul.f32 %v495, %v495
          %v498 = vsub.f32 %v496, %v497
          %v499 = vmul.f32 %v494, 1.442695
          %v500 = vpow.pop %v499
          %v501 = vsub.f32 %v498, %v500
          %vm502 = vcmask 60416
          %v503 = vsel %vm502, %v501, 0.0
          %504 = vadd.xlane.f32.xlu0 %v503
          %v505 = vpop.xlane.xlu0 %504
          %v506 = vrot.slane %v505, 4
          %v507 = vadd.f32 %v505, %v506
          %v508 = vrot.slane %v507, 2
          %v509 = vadd.f32 %v507, %v508
          %v510 = vrot.slane %v509, 1
          %v511 = vadd.f32 %v509, %v510
          %s512 = vtos %v511
          %s513 = smul.f32 %s512, -0.125
          %p514 = scmp.eq.s32.totalorder %s29, 0
          %s515 = scalar_select %p514, %s513, 0.0
          %s516 = sadd.f32 %s493, %s515
          %v517 = vstv %s516
          %518 = vst [vmem:[%s320] sm:$0xff] %v517
        $region60: #{tpu_custom_call.1} parent=35 // pred_fallthru
          _
        %s519 = sand.u32 %s151, 1
        %s520 = scalar_lea.sflag [#allocation5], %s519
        %s521 = sand.u32 %s151, 1
        %s522 = smul.addr %s521, 8
        %s523 = scalar_lea.vmem [#allocation11], %s522
        // Predicated region
        $region61: #{tpu_custom_call.1} parent=35 // pred_check
          %p524 = pneg %p161
        $region62: #{tpu_custom_call.1} parent=35 // pred_check_branch
          %526 = sbr.rel (%p524) target = $region64
        $region63: #{tpu_custom_call.1} parent=35 // pred_region
          %528 = vsyncadd %s520, 0
          %s529 = smul.addr %s29, 8
          %s530 = scalar_lea.hbm %s4, %s529
          %s532 = sshll.u32 %s523, 4
          %s533 = int_to_ptr.vmem [resolvable:$true] %s532
          %s534 = sshll.u32 %s530, 4
          %s535 = int_to_ptr.hbm [resolvable:$true] %s534
          %537 = dma.vmem_to_hbm [thread:$0]  %s533, 128, %s535, %s520
        $region64: #{tpu_custom_call.1} parent=35 // pred_fallthru
          _
      $region36: #{tpu_custom_call.1} parent=5 // pred_fallthru
        _
      %p538 = scmp.le.s32.totalorder 2, %s20
      // Predicated region
      $region65: #{tpu_custom_call.1} parent=5 // pred_check
        %p539 = pneg %p538
      $region66: #{tpu_custom_call.1} parent=5 // pred_check_branch
        %541 = sbr.rel (%p539) target = $region68
      $region67: #{tpu_custom_call.1} parent=5 // pred_region
        %s542 = ssub.s32 %s20, 2
        // Predicated region
        $region69: #{tpu_custom_call.1} parent=67 // pred_check
          %p543 = pneg %p167
        $region70: #{tpu_custom_call.1} parent=67 // pred_check_branch
          %545 = sbr.rel (%p543) target = $region72
        $region71: #{tpu_custom_call.1} parent=67 // pred_region
          %s546 = sand.u32 %s152, 1
          %s547 = scalar_lea.sflag [#allocation5], %s546
          %s548 = sand.u32 %s152, 1
          %s549 = smul.addr %s548, 8
          %s550 = scalar_lea.vmem [#allocation11], %s549
          %552 = dma.done %s547, 128
        $region72: #{tpu_custom_call.1} parent=67 // pred_fallthru
          _
      $region68: #{tpu_custom_call.1} parent=5 // pred_fallthru
        _
    $region6: #{tpu_custom_call.1} parent=1 // loop_footer
      %s24 = sadd.s32 1, %s20
    $region7: #{tpu_custom_call.1} parent=1 // loop_footer_branch
      %19 = sbr.rel target = $region3
    $region8: #{tpu_custom_call.1} parent=1 // loop_exit
      _
    %553 = vsyncpa [#allocation4], 1
    %s554 = scalar_lea.sflag [#allocation4], 1
    %555 = vsyncpa %s554, 1
    %556 = vsyncpa [#allocation7], 1
    %s557 = scalar_lea.sflag [#allocation7], 1
    %558 = vsyncpa %s557, 1
    %559 = vsyncpa [#allocation10], 1
    %560 = vsyncpa [#allocation5], 1
    %s561 = scalar_lea.sflag [#allocation5], 1
    %562 = vsyncpa %s561, 1

</llo_original>
